<compile_context>
chip_gen: v7x
topology: tpu7x:2x2x1
jax: 0.10.0
libtpu: 0.0.40
codegen_flags: <defaults>
</compile_context>

<pallas_src>
import functools

import jax
import jax.numpy as jnp
from jax.experimental import pallas as pl
from jax.experimental.pallas import tpu as pltpu


# ---------------------------------------------------------------------------
# VMEM budgeting (generation-aware).
# ---------------------------------------------------------------------------

def _vmem_budget_bytes():
    cap = 64 * 1024 * 1024  # conservative fallback (v7x-sized)
    try:
        info = pltpu.get_tpu_info()
        cap = int(getattr(info, "vmem_capacity_bytes", cap) or cap)
    except Exception:
        pass
    # 128 MiB parts (v5e/v6e): spend ~78% so the fused 1R+1W path covers bigger
    # images. 64 MiB parts (v7x): stay at ~60% to leave compiler headroom.
    frac = 0.78 if cap >= 96 * 1024 * 1024 else 0.60
    return int(cap * frac)


def _footprint_bytes(block_bytes, C, Cr):
    """Estimated peak VMEM use for one pallas_call with the given I/O block."""
    c_pad = ((C + 7) // 8) * 8
    io = 4 * block_bytes                              # in + out, double-buffered
    params = 2 * 4 * (2 * C * Cr + Cr + C)            # f32 weights/biases, 2x buffered
    scratch = 2 * c_pad * 128 * 4                     # (C,128) sum + padded (C,1) scale
    internal = 4 << 20                                # compiler internal scratch headroom
    return io + params + scratch + internal


def _pick_hw_tile(HW, C, Cr, itemsize, budget):
    """Largest lane-dense (multiple-of-128) spatial tile fitting the budget."""
    hw_pad = pl.cdiv(HW, 128) * 128
    avail = budget - _footprint_bytes(0, C, Cr)
    t = (max(avail, 0) // (4 * C * itemsize)) // 128 * 128
    t = min(int(t), hw_pad)
    return max(t, 128)


# ---------------------------------------------------------------------------
# Kernels.
# ---------------------------------------------------------------------------

def _se_scale(mean, w1t_ref, b1_ref, w2_ref, b2_ref):
    """Tiny squeeze-excite MLP on the VPU/XLU (no MXU: N=1 matvecs would waste
    the systolic array and add push/pop latency on the serial path)."""
    # y1 = W1 @ mean == sum_c W1^T[c, :] * mean[c]   -> (1, Cr)
    y1 = jnp.sum(w1t_ref[...] * mean, axis=0, keepdims=True) + b1_ref[...]
    y1 = jnp.where(y1 >= 0.0, y1, 0.1 * y1)           # LeakyReLU(0.1)
    # y2 = W2 @ y1  == sum_r W2[:, r] * y1[r]        -> (C, 1)
    y2 = jnp.sum(w2_ref[...] * y1, axis=-1, keepdims=True) + b2_ref[...]
    return jax.nn.sigmoid(y2)                          # (C, 1) f32


def _ca_fused_kernel(x_ref, w1t_ref, b1_ref, w2_ref, b2_ref, o_ref, *, inv_hw):
    # x_ref block: (1, C, HW) in the native dtype; HW on lanes.
    x = x_ref[0]                                                        # (C, HW)
    mean = jnp.sum(x, axis=-1, keepdims=True, dtype=jnp.float32) * inv_hw  # (C, 1)
    scale = _se_scale(mean, w1t_ref, b1_ref, w2_ref, b2_ref)            # (C, 1)
    o_ref[0] = (x * scale.astype(x.dtype)).astype(o_ref.dtype)


def _ca_tiled_kernel(x_ref, w1t_ref, b1_ref, w2_ref, b2_ref, o_ref,
                     sum_ref, scale_ref, *, inv_hw, hw, hw_tile):
    # grid = (batch, phase, spatial-tile); phase 0: reduce, phase 1: rescale.
    phase = pl.program_id(1)
    t = pl.program_id(2)

    @pl.when((phase == 0) & (t == 0))
    def _():
        sum_ref[...] = jnp.zeros_like(sum_ref)

    @pl.when(phase == 0)
    def _():
        base = t * hw_tile

        def masked_group(g):
            # Lane-aligned 128-wide slice; mask lanes past the true spatial
            # extent (handles the cdiv tail tile whose padding is unspecified).
            xg = x_ref[0, :, g * 128:(g + 1) * 128].astype(jnp.float32)  # (C,128)
            lane = jax.lax.broadcasted_iota(jnp.int32, xg.shape, 1) + (base + g * 128)
            return jnp.where(lane < hw, xg, 0.0)

        # Lane-parallel partial sums: only vreg-aligned VPU adds per tile; the
        # single 128->1 cross-lane (XLU) reduce happens once per batch below.
        acc = masked_group(0)
        for g in range(1, hw_tile // 128):
            acc = acc + masked_group(g)
        sum_ref[...] += acc

    @pl.when((phase == 1) & (t == 0))
    def _():
        mean = jnp.sum(sum_ref[...], axis=-1, keepdims=True) * inv_hw   # (C, 1)
        scale_ref[...] = _se_scale(mean, w1t_ref, b1_ref, w2_ref, b2_ref)

    @pl.when(phase == 1)
    def _():
        x = x_ref[0]                                                    # (C, T)
        # OOB lanes of the tail tile are dropped by the masked store Pallas
        # emits for the partial output block.
        o_ref[0] = (x * scale_ref[...].astype(x.dtype)).astype(o_ref.dtype)


# ---------------------------------------------------------------------------
# pallas_call wrappers.
# ---------------------------------------------------------------------------

def _ca_fused(x, w1t, b1m, w2m, b2m, vmem_limit, donate):
    N, C, HW = x.shape
    Cr = w1t.shape[1]
    kernel = functools.partial(_ca_fused_kernel, inv_hw=1.0 / HW)
    return pl.pallas_call(
        kernel,
        out_shape=jax.ShapeDtypeStruct((N, C, HW), x.dtype),
        grid_spec=pltpu.PrefetchScalarGridSpec(
            num_scalar_prefetch=0,
            grid=(N,),
            in_specs=[
                pl.BlockSpec((1, C, HW), lambda n: (n, 0, 0)),
                # Tiny params: full-array blocks + constant index maps stay
                # VMEM-resident across the grid.
                pl.BlockSpec((C, Cr), lambda n: (0, 0)),
                pl.BlockSpec((1, Cr), lambda n: (0, 0)),
                pl.BlockSpec((C, Cr), lambda n: (0, 0)),
                pl.BlockSpec((C, 1), lambda n: (0, 0)),
            ],
            out_specs=pl.BlockSpec((1, C, HW), lambda n: (n, 0, 0)),
        ),
        compiler_params=pltpu.CompilerParams(
            dimension_semantics=("parallel",),
            vmem_limit_bytes=int(vmem_limit)),
        input_output_aliases=({0: 0} if donate else {}),
    )(x, w1t, b1m, w2m, b2m)


def _ca_tiled(x, w1t, b1m, w2m, b2m, hw_tile, vmem_limit, donate):
    N, C, HW = x.shape
    Cr = w1t.shape[1]
    n_tiles = pl.cdiv(HW, hw_tile)
    kernel = functools.partial(_ca_tiled_kernel, inv_hw=1.0 / HW,
                               hw=HW, hw_tile=hw_tile)
    return pl.pallas_call(
        kernel,
        out_shape=jax.ShapeDtypeStruct((N, C, HW), x.dtype),
        grid_spec=pltpu.PrefetchScalarGridSpec(
            num_scalar_prefetch=0,
            grid=(N, 2, n_tiles),
            in_specs=[
                pl.BlockSpec((1, C, hw_tile), lambda n, p, t: (n, 0, t)),
                pl.BlockSpec((C, Cr), lambda n, p, t: (0, 0)),
                pl.BlockSpec((1, Cr), lambda n, p, t: (0, 0)),
                pl.BlockSpec((C, Cr), lambda n, p, t: (0, 0)),
                pl.BlockSpec((C, 1), lambda n, p, t: (0, 0)),
            ],
            # Phase 0: output index pinned at tile 0 (revisited, never written,
            # not flushed); phase 1 writes every tile exactly once => 2R + 1W.
            out_specs=pl.BlockSpec((1, C, hw_tile), lambda n, p, t: (n, 0, t * p)),
            scratch_shapes=[pltpu.VMEM((C, 128), jnp.float32),   # lane-parallel sums
                            pltpu.VMEM((C, 1), jnp.float32)],    # sigmoid scale
        ),
        compiler_params=pltpu.CompilerParams(
            dimension_semantics=("parallel", "arbitrary", "arbitrary"),
            vmem_limit_bytes=int(vmem_limit)),
        input_output_aliases=({0: 0} if donate else {}),
    )(x, w1t, b1m, w2m, b2m)


# ---------------------------------------------------------------------------
# Public entry point.
# ---------------------------------------------------------------------------

def ca_layer(x_nchw, w1, b1, w2, b2, *, hw_tile=None, vmem_budget=None,
             donate=False):
    """x_nchw: (N, C, H, W). w1: (Cr, C, 1, 1), b1: (Cr,), w2: (C, Cr, 1, 1), b2: (C,)."""
    N, C, H, W = x_nchw.shape
    Cr = w1.shape[0]
    HW = H * W

    if vmem_budget is None:
        vmem_budget = _vmem_budget_bytes()

    # Free reshapes + one tiny weight transpose (Cr*C elements) in the wrapper.
    x = x_nchw.reshape(N, C, HW)
    w1t = jnp.transpose(w1.reshape(Cr, C)).astype(jnp.float32)   # (C, Cr)
    w2m = w2.reshape(C, Cr).astype(jnp.float32)                  # (C, Cr)
    b1m = b1.reshape(1, Cr).astype(jnp.float32)
    b2m = b2.reshape(C, 1).astype(jnp.float32)

    block_bytes = C * HW * x.dtype.itemsize
    fits_fused = _footprint_bytes(block_bytes, C, Cr) <= vmem_budget

    if hw_tile is None and fits_fused:
        out = _ca_fused(x, w1t, b1m, w2m, b2m, vmem_budget, donate)
    else:
        if hw_tile is None:
            hw_tile = _pick_hw_tile(HW, C, Cr, x.dtype.itemsize, vmem_budget)
        hw_tile = max(128, -(-int(hw_tile) // 128) * 128)   # lane-dense tile
        out = _ca_tiled(x, w1t, b1m, w2m, b2m, hw_tile, vmem_budget, donate)

    return out.reshape(N, C, H, W)


def ca_reference(x, w1, b1, w2, b2):
    """Pure-JAX reference with the same math as the PyTorch module."""
    Cr, C = w1.shape[0], w1.shape[1]
    y = jnp.mean(x, axis=(2, 3), keepdims=True)                       # (N,C,1,1)
    y = jnp.einsum("oc,ncij->noij", w1.reshape(Cr, C), y) + b1.reshape(1, Cr, 1, 1)
    y = jnp.where(y >= 0, y, 0.1 * y)
    y = jnp.einsum("oc,ncij->noij", w2.reshape(C, Cr), y) + b2.reshape(1, C, 1, 1)
    return x * jax.nn.sigmoid(y)


if __name__ == "__main__":
    # Channel must be >= 16 so that channel // 16 >= 1 (as in the PyTorch module).
    N, C, H, W = 2, 32, 16, 16
    Cr = C // 16

    key = jax.random.PRNGKey(0)
    kx, kw1, kb1, kw2, kb2 = jax.random.split(key, 5)

    x = jax.random.normal(kx, (N, C, H, W), dtype=jnp.float32)
    w1 = jax.random.normal(kw1, (Cr, C, 1, 1), dtype=jnp.float32) * 0.1
    b1 = jax.random.normal(kb1, (Cr,), dtype=jnp.float32) * 0.1
    w2 = jax.random.normal(kw2, (C, Cr, 1, 1), dtype=jnp.float32) * 0.1
    b2 = jax.random.normal(kb2, (C,), dtype=jnp.float32) * 0.1

    # Path 1: fused 1R+1W — one (C, HW) block per batch (auto-selected).
    out = jax.block_until_ready(ca_layer(x, w1, b1, w2, b2))
    ref = ca_reference(x, w1, b1, w2, b2)
    assert jnp.allclose(out, ref, atol=1e-5, rtol=1e-5), "fused kernel mismatch"

    # Path 2: tiled two-phase with N>1 and n_tiles>1 (exercises the pinned
    # revisited-output-block assumption): HW = 1024 split into 4 tiles of 256.
    x2 = jax.random.normal(kx, (2, C, 32, 32), dtype=jnp.float32)
    out2 = jax.block_until_ready(ca_layer(x2, w1, b1, w2, b2, hw_tile=256))
    ref2 = ca_reference(x2, w1, b1, w2, b2)
    assert jnp.allclose(out2, ref2, atol=1e-5, rtol=1e-5), "tiled kernel mismatch"

    # Path 3: tiled with a masked tail tile — HW = 18*20 = 360 is not a multiple
    # of 128, so the last tile is partially out-of-bounds (masked reduce,
    # dropped OOB store).
    x3 = jax.random.normal(kx, (2, C, 18, 20), dtype=jnp.float32)
    out3 = jax.block_until_ready(ca_layer(x3, w1, b1, w2, b2, hw_tile=128))
    ref3 = ca_reference(x3, w1, b1, w2, b2)
    assert jnp.allclose(out3, ref3, atol=1e-5, rtol=1e-5), "masked-tail kernel mismatch"

    print("KERNEL_OK")
</pallas_src>

<mosaic_0001>
module attributes {stable_mosaic.version = 11 : i64} {
  func.func @_ca_fused_kernel(%arg0: i32, %arg1: memref<1x32x256xf32, #tpu.memory_space<vmem>>, %arg2: memref<32x2xf32, #tpu.memory_space<vmem>>, %arg3: memref<1x2xf32, #tpu.memory_space<vmem>>, %arg4: memref<32x2xf32, #tpu.memory_space<vmem>>, %arg5: memref<32x1xf32, #tpu.memory_space<vmem>>, %arg6: memref<1x32x256xf32, #tpu.memory_space<vmem>>) attributes {dimension_semantics = [#tpu.dimension_semantics<parallel>], iteration_bounds = array<i64: 2>, scalar_prefetch = 0 : i64, scratch_operands = 0 : i64, tpu.core_type = #tpu.core_type<tc>, window_params = [{transform_indices = @transform_0, window_bounds = array<i64: 1, 32, 256>}, {pipeline_mode = #tpu.pipeline_mode<synchronous>, transform_indices = @transform_1, window_bounds = array<i64: 32, 2>}, {pipeline_mode = #tpu.pipeline_mode<synchronous>, transform_indices = @transform_2, window_bounds = array<i64: 1, 2>}, {pipeline_mode = #tpu.pipeline_mode<synchronous>, transform_indices = @transform_3, window_bounds = array<i64: 32, 2>}, {pipeline_mode = #tpu.pipeline_mode<synchronous>, transform_indices = @transform_4, window_bounds = array<i64: 32, 1>}, {transform_indices = @transform_5, window_bounds = array<i64: 1, 32, 256>}]} {
    %c0 = arith.constant 0 : index
    %c0_0 = arith.constant 0 : index
    %c0_1 = arith.constant 0 : index
    %0 = vector.load %arg1[%c0, %c0_0, %c0_1] : memref<1x32x256xf32, #tpu.memory_space<vmem>>, vector<1x32x256xf32>
    %1 = vector.shape_cast %0 : vector<1x32x256xf32> to vector<32x256xf32>
    %cst = arith.constant dense<0.000000e+00> : vector<32xf32>
    %2 = vector.multi_reduction <add>, %1, %cst [1] : vector<32x256xf32> to vector<32xf32>
    %3 = vector.shape_cast %2 : vector<32xf32> to vector<32x1xf32>
    %cst_2 = arith.constant 3.906250e-03 : f32
    %4 = vector.broadcast %cst_2 : f32 to vector<32x1xf32>
    %5 = arith.mulf %3, %4 : vector<32x1xf32>
    %c0_3 = arith.constant 0 : index
    %c0_4 = arith.constant 0 : index
    %6 = vector.load %arg2[%c0_3, %c0_4] : memref<32x2xf32, #tpu.memory_space<vmem>>, vector<32x2xf32>
    %7 = vector.broadcast %5 : vector<32x1xf32> to vector<32x2xf32>
    %8 = arith.mulf %6, %7 : vector<32x2xf32>
    %cst_5 = arith.constant dense<0.000000e+00> : vector<2xf32>
    %9 = vector.multi_reduction <add>, %8, %cst_5 [0] : vector<32x2xf32> to vector<2xf32>
    %10 = vector.shape_cast %9 : vector<2xf32> to vector<1x2xf32>
    %c0_6 = arith.constant 0 : index
    %c0_7 = arith.constant 0 : index
    %11 = vector.load %arg3[%c0_6, %c0_7] : memref<1x2xf32, #tpu.memory_space<vmem>>, vector<1x2xf32>
    %12 = arith.addf %10, %11 : vector<1x2xf32>
    %cst_8 = arith.constant 0.000000e+00 : f32
    %13 = vector.broadcast %cst_8 : f32 to vector<1x2xf32>
    %14 = arith.cmpf oge, %12, %13 : vector<1x2xf32>
    %cst_9 = arith.constant 1.000000e-01 : f32
    %15 = vector.broadcast %cst_9 : f32 to vector<1x2xf32>
    %16 = arith.mulf %15, %12 : vector<1x2xf32>
    %17 = arith.select %14, %12, %16 : vector<1x2xi1>, vector<1x2xf32>
    %c0_10 = arith.constant 0 : index
    %c0_11 = arith.constant 0 : index
    %18 = vector.load %arg4[%c0_10, %c0_11] : memref<32x2xf32, #tpu.memory_space<vmem>>, vector<32x2xf32>
    %19 = vector.broadcast %17 : vector<1x2xf32> to vector<32x2xf32>
    %20 = arith.mulf %18, %19 : vector<32x2xf32>
    %cst_12 = arith.constant dense<0.000000e+00> : vector<32xf32>
    %21 = vector.multi_reduction <add>, %20, %cst_12 [1] : vector<32x2xf32> to vector<32xf32>
    %22 = vector.shape_cast %21 : vector<32xf32> to vector<32x1xf32>
    %c0_13 = arith.constant 0 : index
    %c0_14 = arith.constant 0 : index
    %23 = vector.load %arg5[%c0_13, %c0_14] : memref<32x1xf32, #tpu.memory_space<vmem>>, vector<32x1xf32>
    %24 = arith.addf %22, %23 : vector<32x1xf32>
    %25 = arith.negf %24 : vector<32x1xf32>
    %26 = math.exp %25 : vector<32x1xf32>
    %cst_15 = arith.constant 1.000000e+00 : f32
    %27 = vector.broadcast %cst_15 : f32 to vector<32x1xf32>
    %28 = arith.addf %27, %26 : vector<32x1xf32>
    %29 = arith.divf %27, %28 : vector<32x1xf32>
    %30 = vector.broadcast %29 : vector<32x1xf32> to vector<32x256xf32>
    %31 = arith.mulf %1, %30 : vector<32x256xf32>
    %c0_16 = arith.constant 0 : index
    %c0_17 = arith.constant 0 : index
    %c0_18 = arith.constant 0 : index
    %32 = vector.load %arg6[%c0_16, %c0_17, %c0_18] : memref<1x32x256xf32, #tpu.memory_space<vmem>>, vector<1x32x256xf32>
    %33 = vector.shape_cast %32 : vector<1x32x256xf32> to vector<32x256xf32>
    %34 = vector.shape_cast %31 : vector<32x256xf32> to vector<1x32x256xf32>
    tpu.vector_store %arg6[%c0_16, %c0_17, %c0_18], %34 {strides = array<i32>} : memref<1x32x256xf32, #tpu.memory_space<vmem>>, vector<1x32x256xf32>,
    return
  }
  func.func @transform_0(%arg0: i32) -> (i32, i32, i32) {
    %c0_i32 = arith.constant 0 : i32
    %c0_i32_0 = arith.constant 0 : i32
    %c0_i32_1 = arith.constant 0 : i32
    return %arg0, %c0_i32, %c0_i32_0 : i32, i32, i32
  }
  func.func @transform_1(%arg0: i32) -> (i32, i32) {
    %c0_i32 = arith.constant 0 : i32
    %c0_i32_0 = arith.constant 0 : i32
    %c0_i32_1 = arith.constant 0 : i32
    return %c0_i32, %c0_i32_0 : i32, i32
  }
  func.func @transform_2(%arg0: i32) -> (i32, i32) {
    %c0_i32 = arith.constant 0 : i32
    %c0_i32_0 = arith.constant 0 : i32
    %c0_i32_1 = arith.constant 0 : i32
    return %c0_i32, %c0_i32_0 : i32, i32
  }
  func.func @transform_3(%arg0: i32) -> (i32, i32) {
    %c0_i32 = arith.constant 0 : i32
    %c0_i32_0 = arith.constant 0 : i32
    %c0_i32_1 = arith.constant 0 : i32
    return %c0_i32, %c0_i32_0 : i32, i32
  }
  func.func @transform_4(%arg0: i32) -> (i32, i32) {
    %c0_i32 = arith.constant 0 : i32
    %c0_i32_0 = arith.constant 0 : i32
    %c0_i32_1 = arith.constant 0 : i32
    return %c0_i32, %c0_i32_0 : i32, i32
  }
  func.func @transform_5(%arg0: i32) -> (i32, i32, i32) {
    %c0_i32 = arith.constant 0 : i32
    %c0_i32_0 = arith.constant 0 : i32
    %c0_i32_1 = arith.constant 0 : i32
    return %arg0, %c0_i32, %c0_i32_0 : i32, i32, i32
  }
}

</mosaic_0001>

<llo_original>
// kernel: tpu_custom_call.1
$region0: #{tpu_custom_call.1}
  #allocation0 [shape = 'u32[]', space=smem, size = 0x4, offset = 0x4, fixed_abs, tag = 'smem constant byte address 0x4 - core index']
  #allocation1 [shape = 'u32[144,128]{1,0:T(1,128)}', space=vmem, size = 0x12000, scoped, tag = 'internal scratch']
  %s0 = inlined_call_operand.hbm [shape: f32[2,32,256], index: 0, kind: input, shape index: {}]
  %s1 = inlined_call_operand.vmem [shape: f32[32,2], index: 1, kind: input, shape index: {}]
  %s2 = inlined_call_operand.vmem [shape: f32[1,2], index: 2, kind: input, shape index: {}]
  %s3 = inlined_call_operand.vmem [shape: f32[32,2], index: 3, kind: input, shape index: {}]
  %s4 = inlined_call_operand.vmem [shape: f32[32,1], index: 4, kind: input, shape index: {}]
  %s5 = inlined_call_operand.hbm [shape: f32[2,32,256], index: 5, kind: output, shape index: {}]
  %s6 = sld [smem:[#allocation0]]
  $region57: #{tpu_custom_call.1} parent=0
    _
  %s8 = ssub.s32 1, %s6
  %s9 = scalar_select 0, %s8, %s6
  $region1: #{tpu_custom_call.1} parent=0
    #allocation2 [shape = 'u8[65536]{0}', space=vmem, size = 0x10000, scoped, tag = 'input window, operand 0']
    #allocation3 [shape = 's32[2]{0}', space=sflag, size = 0x8, scoped, tag = 'scoped memory for tpu_custom_call.1']
    #allocation4 [shape = 's32[2]{0}', space=sflag, size = 0x8, scoped, tag = 'scoped memory for tpu_custom_call.1']
    #allocation5 [shape = 'u8[65536]{0}', space=vmem, size = 0x10000, scoped, tag = 'output window, operand 0']
    %10 = vsyncpa [#allocation3], 0
    %s11 = scalar_lea.sflag [#allocation3], 1
    %12 = vsyncpa %s11, 0
    %13 = vsyncpa [#allocation4], 0
    %s14 = scalar_lea.sflag [#allocation4], 1
    %15 = vsyncpa %s14, 0
    loop: start=0, step=1, limit=4
    $region2: #{tpu_custom_call.1} parent=1 // loop_pre_header
      _
    $region3: #{tpu_custom_call.1} parent=1 // loop_header
      %s17 = sphi 0, %s21
      %p18 = scmp.ge.s32.totalorder %s17, 4
      %s27 = sphi 0, %s29
      %s30 = sphi 0, %s27
      %s31 = sphi 0, %s30
      %s47 = sphi 0, %s31
      %s51 = sphi 0, %s51
      %s53 = sphi 0, %s51
      %s54 = sphi 0, %s53
      %s68 = sphi 0, %s54
      %s72 = sphi 0, %s72
      %s74 = sphi 0, %s72
      %s75 = sphi 0, %s74
      %s89 = sphi 0, %s75
      %s93 = sphi 0, %s93
      %s95 = sphi 0, %s93
      %s96 = sphi 0, %s95
      %s110 = sphi 0, %s96
      %s114 = sphi 0, %s114
      %s116 = sphi 0, %s114
      %s117 = sphi 0, %s116
      %s131 = sphi 0, %s117
      %s137 = sphi 0, %s139
      %s140 = sphi 0, %s137
      %s141 = sphi 0, %s140
      %s157 = sphi 0, %s141
    $region4: #{tpu_custom_call.1} parent=1 // loop_header_branch
      %20 = sbr.rel (%p18) target = $region8
    $region5: #{tpu_custom_call.1} parent=1 // loop_body
      %s22 = ssub.s32 %s17, 1
      %s23 = ssub.s32 %s17, 2
      %s24 = sadd.s32 %s17, 1
      %s25 = ssub.s32 %s17, %s24
      %p26 = scmp.eq.s32.totalorder %s25, 0
      %s28 = sadd.s32 %s27, 1
      %s29 = scalar_select %p26, %s27, %s28
      %p32 = pneg %p26
      %p33 = scmp.eq.s32.totalorder %s17, 1
      %p34 = por %p32, %p33
      %p35 = scmp.ne.s32.totalorder %s27, %s30
      %p36 = scmp.eq.s32.totalorder %s17, 0
      %p37 = por %p35, %p36
      %p38 = scmp.ne.s32.totalorder %s27, %s30
      %p39 = scmp.eq.s32.totalorder %s22, 1
      %p40 = por %p38, %p39
      %p41 = scmp.ne.s32.totalorder %s30, %s31
      %p42 = scmp.eq.s32.totalorder %s22, 0
      %p43 = por %p41, %p42
      %p44 = scmp.ne.s32.totalorder %s30, %s31
      %p45 = scmp.eq.s32.totalorder %s23, 1
      %p46 = por %p44, %p45
      %p48 = scmp.ne.s32.totalorder %s31, %s47
      %p49 = scmp.eq.s32.totalorder %s23, 0
      %p50 = por %p48, %p49
      %s52 = sadd.s32 %s51, 1
      %p55 = scmp.eq.s32.totalorder %s17, 1
      %p56 = scmp.ne.s32.totalorder %s51, %s53
      %p57 = scmp.eq.s32.totalorder %s17, 0
      %p58 = por %p56, %p57
      %p59 = scmp.ne.s32.totalorder %s51, %s53
      %p60 = scmp.eq.s32.totalorder %s22, 1
      %p61 = por %p59, %p60
      %p62 = scmp.ne.s32.totalorder %s53, %s54
      %p63 = scmp.eq.s32.totalorder %s22, 0
      %p64 = por %p62, %p63
      %p65 = scmp.ne.s32.totalorder %s53, %s54
      %p66 = scmp.eq.s32.totalorder %s23, 1
      %p67 = por %p65, %p66
      %p69 = scmp.ne.s32.totalorder %s54, %s68
      %p70 = scmp.eq.s32.totalorder %s23, 0
      %p71 = por %p69, %p70
      %s73 = sadd.s32 %s72, 1
      %p76 = scmp.eq.s32.totalorder %s17, 1
      %p77 = scmp.ne.s32.totalorder %s72, %s74
      %p78 = scmp.eq.s32.totalorder %s17, 0
      %p79 = por %p77, %p78
      %p80 = scmp.ne.s32.totalorder %s72, %s74
      %p81 = scmp.eq.s32.totalorder %s22, 1
      %p82 = por %p80, %p81
      %p83 = scmp.ne.s32.totalorder %s74, %s75
      %p84 = scmp.eq.s32.totalorder %s22, 0
      %p85 = por %p83, %p84
      %p86 = scmp.ne.s32.totalorder %s74, %s75
      %p87 = scmp.eq.s32.totalorder %s23, 1
      %p88 = por %p86, %p87
      %p90 = scmp.ne.s32.totalorder %s75, %s89
      %p91 = scmp.eq.s32.totalorder %s23, 0
      %p92 = por %p90, %p91
      %s94 = sadd.s32 %s93, 1
      %p97 = scmp.eq.s32.totalorder %s17, 1
      %p98 = scmp.ne.s32.totalorder %s93, %s95
      %p99 = scmp.eq.s32.totalorder %s17, 0
      %p100 = por %p98, %p99
      %p101 = scmp.ne.s32.totalorder %s93, %s95
      %p102 = scmp.eq.s32.totalorder %s22, 1
      %p103 = por %p101, %p102
      %p104 = scmp.ne.s32.totalorder %s95, %s96
      %p105 = scmp.eq.s32.totalorder %s22, 0
      %p106 = por %p104, %p105
      %p107 = scmp.ne.s32.totalorder %s95, %s96
      %p108 = scmp.eq.s32.totalorder %s23, 1
      %p109 = por %p107, %p108
      %p111 = scmp.ne.s32.totalorder %s96, %s110
      %p112 = scmp.eq.s32.totalorder %s23, 0
      %p113 = por %p111, %p112
      %s115 = sadd.s32 %s114, 1
      %p118 = scmp.eq.s32.totalorder %s17, 1
      %p119 = scmp.ne.s32.totalorder %s114, %s116
      %p120 = scmp.eq.s32.totalorder %s17, 0
      %p121 = por %p119, %p120
      %p122 = scmp.ne.s32.totalorder %s114, %s116
      %p123 = scmp.eq.s32.totalorder %s22, 1
      %p124 = por %p122, %p123
      %p125 = scmp.ne.s32.totalorder %s116, %s117
      %p126 = scmp.eq.s32.totalorder %s22, 0
      %p127 = por %p125, %p126
      %p128 = scmp.ne.s32.totalorder %s116, %s117
      %p129 = scmp.eq.s32.totalorder %s23, 1
      %p130 = por %p128, %p129
      %p132 = scmp.ne.s32.totalorder %s117, %s131
      %p133 = scmp.eq.s32.totalorder %s23, 0
      %p134 = por %p132, %p133
      %s135 = ssub.s32 %s17, %s24
      %p136 = scmp.eq.s32.totalorder %s135, 0
      %s138 = sadd.s32 %s137, 1
      %s139 = scalar_select %p136, %s137, %s138
      %p142 = pneg %p136
      %p143 = scmp.eq.s32.totalorder %s17, 1
      %p144 = por %p142, %p143
      %p145 = scmp.ne.s32.totalorder %s137, %s140
      %p146 = scmp.eq.s32.totalorder %s17, 0
      %p147 = por %p145, %p146
      %p148 = scmp.ne.s32.totalorder %s137, %s140
      %p149 = scmp.eq.s32.totalorder %s22, 1
      %p150 = por %p148, %p149
      %p151 = scmp.ne.s32.totalorder %s140, %s141
      %p152 = scmp.eq.s32.totalorder %s22, 0
      %p153 = por %p151, %p152
      %p154 = scmp.ne.s32.totalorder %s140, %s141
      %p155 = scmp.eq.s32.totalorder %s23, 1
      %p156 = por %p154, %p155
      %p158 = scmp.ne.s32.totalorder %s141, %s157
      %p159 = scmp.eq.s32.totalorder %s23, 0
      %p160 = por %p158, %p159
      %p161 = scmp.le.s32.totalorder 1, %s17
      %p162 = scmp.lt.s32.totalorder %s17, 3
      %p163 = pnand %p161, %p162
      %p164 = pneg %p163
      // Predicated region
      $region9: #{tpu_custom_call.1} parent=5 // pred_check
        _
      $region10: #{tpu_custom_call.1} parent=5 // pred_check_branch
        %166 = sbr.rel (%p163) target = $region12
      $region11: #{tpu_custom_call.1} parent=5 // pred_region
        %s167 = ssub.s32 %s17, 1
        // Predicated region
        $region13: #{tpu_custom_call.1} parent=11 // pred_check
          %p168 = pneg %p64
        $region14: #{tpu_custom_call.1} parent=11 // pred_check_branch
          %170 = sbr.rel (%p168) target = $region16
        $region15: #{tpu_custom_call.1} parent=11 // pred_region
          _
        $region16: #{tpu_custom_call.1} parent=11 // pred_fallthru
          _
        // Predicated region
        $region17: #{tpu_custom_call.1} parent=11 // pred_check
          %p171 = pneg %p85
        $region18: #{tpu_custom_call.1} parent=11 // pred_check_branch
          %173 = sbr.rel (%p171) target = $region20
        $region19: #{tpu_custom_call.1} parent=11 // pred_region
          _
        $region20: #{tpu_custom_call.1} parent=11 // pred_fallthru
          _
        // Predicated region
        $region21: #{tpu_custom_call.1} parent=11 // pred_check
          %p174 = pneg %p106
        $region22: #{tpu_custom_call.1} parent=11 // pred_check_branch
          %176 = sbr.rel (%p174) target = $region24
        $region23: #{tpu_custom_call.1} parent=11 // pred_region
          _
        $region24: #{tpu_custom_call.1} parent=11 // pred_fallthru
          _
        // Predicated region
        $region25: #{tpu_custom_call.1} parent=11 // pred_check
          %p177 = pneg %p127
        $region26: #{tpu_custom_call.1} parent=11 // pred_check_branch
          %179 = sbr.rel (%p177) target = $region28
        $region27: #{tpu_custom_call.1} parent=11 // pred_region
          _
        $region28: #{tpu_custom_call.1} parent=11 // pred_fallthru
          _
      $region12: #{tpu_custom_call.1} parent=5 // pred_fallthru
        _
      %p180 = scmp.lt.s32.totalorder %s17, 2
      // Predicated region
      $region29: #{tpu_custom_call.1} parent=5 // pred_check
        %p181 = pneg %p180
      $region30: #{tpu_custom_call.1} parent=5 // pred_check_branch
        %183 = sbr.rel (%p181) target = $region32
      $region31: #{tpu_custom_call.1} parent=5 // pred_region
        // Predicated region
        $region33: #{tpu_custom_call.1} parent=31 // pred_check
          %p184 = pneg %p37
        $region34: #{tpu_custom_call.1} parent=31 // pred_check_branch
          %186 = sbr.rel (%p184) target = $region36
        $region35: #{tpu_custom_call.1} parent=31 // pred_region
          %s187 = sand.u32 %s27, 1
          %s188 = scalar_lea.sflag [#allocation3], %s187
          %s189 = sand.u32 %s27, 1
          %s190 = smul.addr %s189, 64
          %s191 = scalar_lea.vmem [#allocation2], %s190
          %s193 = ssub.s32 1024, 1024
          %194 = vsyncadd %s188, %s193
          %s195 = smul.addr %s17, 8
          %s196 = smul.addr %s195, 128
          %s197 = scalar_lea.hbm %s0, %s196
          %s198 = sshll.u32 %s191, 4
          %s199 = int_to_ptr.vmem [resolvable:$true] %s198
          %204 = dma.hbm_to_vmem [thread:$0]  %s197, 1024, %s199, %s188, 256, 256, 16
        $region36: #{tpu_custom_call.1} parent=31 // pred_fallthru
          _
      $region32: #{tpu_custom_call.1} parent=5 // pred_fallthru
        _
      %p205 = scmp.le.s32.totalorder 1, %s17
      %p206 = scmp.lt.s32.totalorder %s17, 3
      %p207 = pnand %p205, %p206
      %p208 = pneg %p207
      // Predicated region
      $region37: #{tpu_custom_call.1} parent=5 // pred_check
        _
      $region38: #{tpu_custom_call.1} parent=5 // pred_check_branch
        %210 = sbr.rel (%p207) target = $region40
      $region39: #{tpu_custom_call.1} parent=5 // pred_region
        %s211 = ssub.s32 %s17, 1
        %s212 = sand.u32 %s30, 1
        %s213 = scalar_lea.sflag [#allocation3], %s212
        %s214 = sand.u32 %s30, 1
        %s215 = smul.addr %s214, 64
        %s216 = scalar_lea.vmem [#allocation2], %s215
        // Predicated region
        $region41: #{tpu_custom_call.1} parent=39 // pred_check
          %p217 = pneg %p43
        $region42: #{tpu_custom_call.1} parent=39 // pred_check_branch
          %219 = sbr.rel (%p217) target = $region44
        $region43: #{tpu_custom_call.1} parent=39 // pred_region
          %220 = dma.done %s213, 1024
        $region44: #{tpu_custom_call.1} parent=39 // pred_fallthru
          _
        %s221 = sand.u32 %s30, 1
        %s222 = scalar_lea.sflag [#allocation3], %s221
        %s223 = sand.u32 %s30, 1
        %s224 = smul.addr %s223, 64
        %s225 = scalar_lea.vmem [#allocation2], %s224
        %p226 = pneg %p43
        %p227 = pneg %p40
        %p228 = pneg %p64
        %p229 = pneg %p61
        %p230 = pneg %p85
        %p231 = pneg %p82
        %p232 = pneg %p106
        %p233 = pneg %p103
        %p234 = pneg %p127
        %p235 = pneg %p124
        %p236 = pneg %p153
        %p237 = pneg %p150
        %s238 = sand.u32 %s140, 1
        %s239 = scalar_lea.sflag [#allocation4], %s238
        %s240 = sand.u32 %s140, 1
        %s241 = smul.addr %s240, 64
        %s242 = scalar_lea.vmem [#allocation5], %s241
        %v243 = vld [vmem:[%s216] sm:$0xff]
        %v244 = vld [vmem:[%s216 + $0x8] sm:$0xff]
        %v245 = vld [vmem:[%s216 + $0x10] sm:$0xff]
        %v246 = vld [vmem:[%s216 + $0x18] sm:$0xff]
        %v247 = vld [vmem:[%s216 + $0x20] sm:$0xff]
        %v248 = vld [vmem:[%s216 + $0x28] sm:$0xff]
        %v249 = vld [vmem:[%s216 + $0x30] sm:$0xff]
        %v250 = vld [vmem:[%s216 + $0x38] sm:$0xff]
        %v251 = vadd.f32 %v243, %v244
        %252 = vadd.xlane.f32.xlu0 %v251
        %v253 = vpop.xlane.xlu0 %252
        %v254 = vadd.f32 %v245, %v246
        %255 = vadd.xlane.f32.xlu0 %v254
        %v256 = vpop.xlane.xlu0 %255
        %v257 = vadd.f32 %v247, %v248
        %258 = vadd.xlane.f32.xlu0 %v257
        %v259 = vpop.xlane.xlu0 %258
        %v260 = vadd.f32 %v249, %v250
        %261 = vadd.xlane.f32.xlu0 %v260
        %v262 = vpop.xlane.xlu0 %261
        %v263 = vmul.f32 %v253, 0.00390625
        %v264 = vmul.f32 %v256, 0.00390625
        %v265 = vmul.f32 %v259, 0.00390625
        %v266 = vmul.f32 %v262, 0.00390625
        %v267 = vld [vmem:[%s1] sm:$0xff]
        %v268 = vld [vmem:[%s1 + $0x8] sm:$0xff]
        %v269 = vld [vmem:[%s1 + $0x10] sm:$0xff]
        %v270 = vld [vmem:[%s1 + $0x18] sm:$0xff]
        %v271 = vmul.f32 %v267, %v263
        %v272 = vmul.f32 %v268, %v264
        %v273 = vmul.f32 %v269, %v265
        %v274 = vmul.f32 %v270, %v266
        %vm275 = vcmask 15360
        %v276 = vsel %vm275, %v271, 0.0
        %v277 = vsel %vm275, %v272, 0.0
        %v278 = vadd.f32 %v276, %v277
        %v279 = vsel %vm275, %v273, 0.0
        %v280 = vadd.f32 %v278, %v279
        %v281 = vsel %vm275, %v274, 0.0
        %v282 = vadd.f32 %v280, %v281
        %v283 = vrot.slane %v282, 4
        %v284 = vadd.f32 %v282, %v283
        %v285 = vrot.slane %v284, 2
        %v286 = vadd.f32 %v284, %v285
        %v287 = vrot.slane %v286, 1
        %v288 = vadd.f32 %v286, %v287
        %v289 = vld [vmem:[%s2] sm:$0x1]
        %v290 = vadd.f32 %v288, %v289
        %vm291 = vcmp.ge.f32.partialorder %v290, 0.0
        %v292 = vmul.f32 %v290, 0.1
        %v293 = vsel %vm291, %v290, %v292
        %v294 = vld [vmem:[%s3] sm:$0xff]
        %v295 = vld [vmem:[%s3 + $0x8] sm:$0xff]
        %v296 = vld [vmem:[%s3 + $0x10] sm:$0xff]
        %v297 = vld [vmem:[%s3 + $0x18] sm:$0xff]
        %v298 = vlaneseq
        %v299 = vshrl.u32 %v298, 7
        %v300 = vsub.s32 0, %v299
        %v301 = vrot.slane %v293, %v300
        %v302 = vmul.f32 %v294, %v301
        %v303 = vmul.f32 %v295, %v301
        %v304 = vmul.f32 %v296, %v301
        %v305 = vmul.f32 %v297, %v301
        %v306 = vsel %vm275, %v302, 0.0
        %307 = vadd.xlane.f32.xlu0 %v306
        %v308 = vpop.xlane.xlu0 %307
        %v309 = vsel %vm275, %v303, 0.0
        %310 = vadd.xlane.f32.xlu0 %v309
        %v311 = vpop.xlane.xlu0 %310
        %v312 = vsel %vm275, %v304, 0.0
        %313 = vadd.xlane.f32.xlu0 %v312
        %v314 = vpop.xlane.xlu0 %313
        %v315 = vsel %vm275, %v305, 0.0
        %316 = vadd.xlane.f32.xlu0 %v315
        %v317 = vpop.xlane.xlu0 %316
        %v318 = vld [vmem:[%s4] sm:$0xff]
        %v319 = vld [vmem:[%s4 + $0x8] sm:$0xff]
        %v320 = vld [vmem:[%s4 + $0x10] sm:$0xff]
        %v321 = vld [vmem:[%s4 + $0x18] sm:$0xff]
        %v322 = vadd.f32 %v308, %v318
        %v323 = vadd.f32 %v311, %v319
        %v324 = vadd.f32 %v314, %v320
        %v325 = vadd.f32 %v317, %v321
        %v326 = vxor.u32 %v322, 2147483648
        %v327 = vxor.u32 %v323, 2147483648
        %v328 = vxor.u32 %v324, 2147483648
        %v329 = vxor.u32 %v325, 2147483648
        %v330 = vmul.f32 %v326, 1.442695
        %v331 = vpow.pop %v330
        %v332 = vmul.f32 %v327, 1.442695
        %v333 = vpow.pop %v332
        %v334 = vmul.f32 %v328, 1.442695
        %v335 = vpow.pop %v334
        %v336 = vmul.f32 %v329, 1.442695
        %v337 = vpow.pop %v336
        %v338 = vadd.f32 %v331, 1.0
        %v339 = vadd.f32 %v333, 1.0
        %v340 = vadd.f32 %v335, 1.0
        %v341 = vadd.f32 %v337, 1.0
        %v342 = vrcp.pop %v338
        %v343 = vmul.f32 1.0, %v342
        %v344 = vrcp.pop %v339
        %v345 = vmul.f32 1.0, %v344
        %v346 = vrcp.pop %v340
        %v347 = vmul.f32 1.0, %v346
        %v348 = vrcp.pop %v341
        %v349 = vmul.f32 1.0, %v348
        %351 = vset.pattern.permute.xlu0 0
        %352 = vperm.xlu0 %351, %v343
        %v353 = vpop.permute.xlu0 %352
        %356 = vset.pattern.permute.xlu0 0
        %357 = vperm.xlu0 %356, %v345
        %v358 = vpop.permute.xlu0 %357
        %361 = vset.pattern.permute.xlu0 0
        %362 = vperm.xlu0 %361, %v347
        %v363 = vpop.permute.xlu0 %362
        %366 = vset.pattern.permute.xlu0 0
        %367 = vperm.xlu0 %366, %v349
        %v368 = vpop.permute.xlu0 %367
        %v370 = vmul.f32 %v243, %v353
        %v371 = vmul.f32 %v244, %v353
        %v372 = vmul.f32 %v245, %v358
        %v373 = vmul.f32 %v246, %v358
        %v374 = vmul.f32 %v247, %v363
        %v375 = vmul.f32 %v248, %v363
        %v376 = vmul.f32 %v249, %v368
        %v377 = vmul.f32 %v250, %v368
        %378 = vst [vmem:[%s242] sm:$0xff] %v370
        %379 = vst [vmem:[%s242 + $0x8] sm:$0xff] %v371
        %380 = vst [vmem:[%s242 + $0x10] sm:$0xff] %v372
        %381 = vst [vmem:[%s242 + $0x18] sm:$0xff] %v373
        %382 = vst [vmem:[%s242 + $0x20] sm:$0xff] %v374
        %383 = vst [vmem:[%s242 + $0x28] sm:$0xff] %v375
        %384 = vst [vmem:[%s242 + $0x30] sm:$0xff] %v376
        %385 = vst [vmem:[%s242 + $0x38] sm:$0xff] %v377
        %s386 = sand.u32 %s140, 1
        %s387 = scalar_lea.sflag [#allocation4], %s386
        %s388 = sand.u32 %s140, 1
        %s389 = smul.addr %s388, 64
        %s390 = scalar_lea.vmem [#allocation5], %s389
        // Predicated region
        $region45: #{tpu_custom_call.1} parent=39 // pred_check
          %p391 = pneg %p150
        $region46: #{tpu_custom_call.1} parent=39 // pred_check_branch
          %393 = sbr.rel (%p391) target = $region48
        $region47: #{tpu_custom_call.1} parent=39 // pred_region
          %s395 = ssub.s32 1024, 1024
          %396 = vsyncadd %s387, %s395
          %s397 = smul.addr %s22, 8
          %s398 = smul.addr %s397, 128
          %s399 = scalar_lea.hbm %s5, %s398
          %s400 = sshll.u32 %s390, 4
          %s401 = int_to_ptr.vmem [resolvable:$true] %s400
          %406 = dma.vmem_to_hbm [thread:$0]  %s401, 1024, %s399, %s387, 256, 256, 16
        $region48: #{tpu_custom_call.1} parent=39 // pred_fallthru
          _
      $region40: #{tpu_custom_call.1} parent=5 // pred_fallthru
        _
      %p407 = scmp.le.s32.totalorder 2, %s17
      // Predicated region
      $region49: #{tpu_custom_call.1} parent=5 // pred_check
        %p408 = pneg %p407
      $region50: #{tpu_custom_call.1} parent=5 // pred_check_branch
        %410 = sbr.rel (%p408) target = $region52
      $region51: #{tpu_custom_call.1} parent=5 // pred_region
        %s411 = ssub.s32 %s17, 2
        // Predicated region
        $region53: #{tpu_custom_call.1} parent=51 // pred_check
          %p412 = pneg %p156
        $region54: #{tpu_custom_call.1} parent=51 // pred_check_branch
          %414 = sbr.rel (%p412) target = $region56
        $region55: #{tpu_custom_call.1} parent=51 // pred_region
          %s415 = sand.u32 %s141, 1
          %s416 = scalar_lea.sflag [#allocation4], %s415
          %s417 = sand.u32 %s141, 1
          %s418 = smul.addr %s417, 64
          %s419 = scalar_lea.vmem [#allocation5], %s418
          %420 = dma.done %s416, 1024
        $region56: #{tpu_custom_call.1} parent=51 // pred_fallthru
          _
      $region52: #{tpu_custom_call.1} parent=5 // pred_fallthru
        _
    $region6: #{tpu_custom_call.1} parent=1 // loop_footer
      %s21 = sadd.s32 1, %s17
    $region7: #{tpu_custom_call.1} parent=1 // loop_footer_branch
      %16 = sbr.rel target = $region3
    $region8: #{tpu_custom_call.1} parent=1 // loop_exit
      _
    %421 = vsyncpa [#allocation3], 1
    %s422 = scalar_lea.sflag [#allocation3], 1
    %423 = vsyncpa %s422, 1
    %424 = vsyncpa [#allocation4], 1
    %s425 = scalar_lea.sflag [#allocation4], 1
    %426 = vsyncpa %s425, 1

</llo_original>
